<compile_context>
chip_gen: v7x
topology: tpu7x:2x2x1
jax: 0.10.0
libtpu: 0.0.40
codegen_flags: <defaults>
</compile_context>

<pallas_src>
import jax
import jax.numpy as jnp
from jax.experimental import pallas as pl
from jax.experimental.pallas import tpu as pltpu

_TARGET_TILE_BYTES = 2 * 1024 * 1024          # ~2 MiB per buffer
_LANE_CANDIDATES = (2048, 1024, 512, 256, 128)
_VMEM_LIMIT = 32 * 1024 * 1024


def _h_sigmoid_kernel(x_ref, o_ref):
    x = x_ref[...]
    # relu6(x + 3) / 6  ==  clamp(x + 3, 0, 6) * (1/6)
    # Python-float constants are weak-typed -> math stays in the input dtype.
    o_ref[...] = (jnp.clip(x + 3.0, 0.0, 6.0) * (1.0 / 6.0)).astype(o_ref.dtype)


def _pick_tm(rows, budget_rows, sub):
    """Rows per tile: whole array if it fits, else a sublane-aligned divisor."""
    if rows <= budget_rows:
        return rows                           # single full block (always legal)
    top = max((budget_rows // sub) * sub, sub)
    for cand in range(top, sub - 1, -sub):
        if rows % cand == 0:                  # divisor tile -> no ragged block
            return cand
    return top                                # rare: last block overhangs


def _run(x2d, rows, lane, tm, allow_fusion):
    grid = (pl.cdiv(rows, tm),)
    return pl.pallas_call(
        _h_sigmoid_kernel,
        out_shape=jax.ShapeDtypeStruct((rows, lane), x2d.dtype),
        grid_spec=pl.GridSpec(
            grid=grid,
            in_specs=[pl.BlockSpec((tm, lane), lambda i: (i, 0))],
            out_specs=pl.BlockSpec((tm, lane), lambda i: (i, 0)),
        ),
        compiler_params=pltpu.CompilerParams(
            dimension_semantics=("parallel",),
            vmem_limit_bytes=_VMEM_LIMIT,
            allow_input_fusion=[True] if allow_fusion else None,
        ),
    )(x2d)


def h_sigmoid(x):
    """Elementwise hard-sigmoid; semantics identical to the PyTorch module."""
    orig_shape = x.shape
    total = x.size
    if total == 0:
        return x

    itemsize = jnp.dtype(x.dtype).itemsize
    sub = max(8, 32 // itemsize)              # packed sublane multiple: 8/16/32

    def budget_rows(lane):
        return max(sub, _TARGET_TILE_BYTES // (lane * itemsize))

    # Fast path: collapse to (rows, lane) with lane a multiple of 128.
    # Reshape only (free) -> ideal 1R + 1W of HBM traffic.
    lane = next((l for l in _LANE_CANDIDATES if total % l == 0), None)
    if lane is not None:
        rows = total // lane
        tm = _pick_tm(rows, budget_rows(lane), sub)
        out2d = _run(x.reshape(rows, lane), rows, lane, tm, allow_fusion=False)
        return out2d.reshape(orig_shape)

    # Slow path (element count not a multiple of 128): pad, compute, slice.
    lane = 512
    rows = -(-total // lane)
    rows = -(-rows // sub) * sub
    flat = jnp.pad(x.reshape(-1), (0, rows * lane - total))
    tm = _pick_tm(rows, budget_rows(lane), sub)
    out2d = _run(flat.reshape(rows, lane), rows, lane, tm, allow_fusion=True)
    return out2d.reshape(-1)[:total].reshape(orig_shape)


if __name__ == "__main__":
    key = jax.random.PRNGKey(0)
    # NCHW input, consistent with typical conv-attention usage.
    x = jax.random.normal(key, (2, 4, 16, 16), dtype=jnp.float32) * 4.0

    y = jax.block_until_ready(h_sigmoid(x))

    # Reference check in plain JAX (same math as torch ReLU6(x + 3) / 6).
    y_ref = jnp.clip(x + 3.0, 0.0, 6.0) / 6.0
    assert y.shape == x.shape and y.dtype == x.dtype
    assert jnp.allclose(y, y_ref, atol=1e-6, rtol=1e-6)

    print("KERNEL_OK")
</pallas_src>

<mosaic_0001>
module attributes {stable_mosaic.version = 11 : i64} {
  func.func @_h_sigmoid_kernel(%arg0: i32, %arg1: memref<1x2048xf32, #tpu.memory_space<vmem>>, %arg2: memref<1x2048xf32, #tpu.memory_space<vmem>>) attributes {dimension_semantics = [#tpu.dimension_semantics<parallel>], iteration_bounds = array<i64: 1>, scalar_prefetch = 0 : i64, scratch_operands = 0 : i64, tpu.core_type = #tpu.core_type<tc>, window_params = [{transform_indices = @transform_0, window_bounds = array<i64: 1, 2048>}, {transform_indices = @transform_1, window_bounds = array<i64: 1, 2048>}]} {
    %c0 = arith.constant 0 : index
    %c0_0 = arith.constant 0 : index
    %0 = vector.load %arg1[%c0, %c0_0] : memref<1x2048xf32, #tpu.memory_space<vmem>>, vector<1x2048xf32>
    %cst = arith.constant 3.000000e+00 : f32
    %1 = vector.broadcast %cst : f32 to vector<1x2048xf32>
    %2 = arith.addf %0, %1 : vector<1x2048xf32>
    %cst_1 = arith.constant 0.000000e+00 : f32
    %cst_2 = arith.constant 6.000000e+00 : f32
    %3 = vector.broadcast %cst_1 : f32 to vector<1x2048xf32>
    %4 = arith.maximumf %3, %2 : vector<1x2048xf32>
    %5 = vector.broadcast %cst_2 : f32 to vector<1x2048xf32>
    %6 = arith.minimumf %5, %4 : vector<1x2048xf32>
    %cst_3 = arith.constant 0.166666672 : f32
    %7 = vector.broadcast %cst_3 : f32 to vector<1x2048xf32>
    %8 = arith.mulf %6, %7 : vector<1x2048xf32>
    %c0_4 = arith.constant 0 : index
    %c0_5 = arith.constant 0 : index
    %9 = vector.load %arg2[%c0_4, %c0_5] : memref<1x2048xf32, #tpu.memory_space<vmem>>, vector<1x2048xf32>
    tpu.vector_store %arg2[%c0_4, %c0_5], %8 {strides = array<i32>} : memref<1x2048xf32, #tpu.memory_space<vmem>>, vector<1x2048xf32>,
    return
  }
  func.func @transform_0(%arg0: i32) -> (i32, i32) {
    %c0_i32 = arith.constant 0 : i32
    %c0_i32_0 = arith.constant 0 : i32
    return %arg0, %c0_i32 : i32, i32
  }
  func.func @transform_1(%arg0: i32) -> (i32, i32) {
    %c0_i32 = arith.constant 0 : i32
    %c0_i32_0 = arith.constant 0 : i32
    return %arg0, %c0_i32 : i32, i32
  }
}

</mosaic_0001>

<llo_original>
// kernel: tpu_custom_call.1
$region0: #{tpu_custom_call.1}
  #allocation0 [shape = 'u32[]', space=smem, size = 0x4, offset = 0x4, fixed_abs, tag = 'smem constant byte address 0x4 - core index']
  #allocation1 [shape = 'u32[144,128]{1,0:T(1,128)}', space=vmem, size = 0x12000, scoped, tag = 'internal scratch']
  %s0 = inlined_call_operand.hbm [shape: f32[1,2048], index: 0, kind: input, shape index: {}]
  %s1 = inlined_call_operand.hbm [shape: f32[1,2048], index: 1, kind: output, shape index: {}]
  %s2 = sld [smem:[#allocation0]]
  $region18: #{tpu_custom_call.1} parent=0
    _
  %s4 = ssub.s32 1, %s2
  %s5 = scalar_select 0, %s4, %s2
  $region1: #{tpu_custom_call.1} parent=0
    #allocation2 [shape = 'u8[8192]{0}', space=vmem, size = 0x2000, scoped, tag = 'input window, operand 0, single buffered']
    #allocation3 [shape = 's32[1]{0}', space=sflag, size = 0x4, scoped, tag = 'scoped memory for tpu_custom_call.1']
    #allocation4 [shape = 's32[1]{0}', space=sflag, size = 0x4, scoped, tag = 'scoped memory for tpu_custom_call.1']
    #allocation5 [shape = 'u8[8192]{0}', space=vmem, size = 0x2000, scoped, tag = 'output window, operand 0, single buffered']
    %6 = vsyncpa [#allocation3], 0
    %7 = vsyncpa [#allocation4], 0
    // Predicated region
    $region2: #{tpu_custom_call.1} parent=1 // pred_check
      _
    $region3: #{tpu_custom_call.1} parent=1 // pred_check_branch
      %9 = sbr.rel (0) target = $region5
    $region4: #{tpu_custom_call.1} parent=1 // pred_region
      %s11 = ssub.s32 256, 256
      %12 = vsyncadd [#allocation3], %s11
      %s14 = sshll.u32 [#allocation2], 4
      %s15 = int_to_ptr.vmem [resolvable:$true] %s14
      %17 = dma.hbm_to_vmem [thread:$0]  %s0, 256, %s15, [#allocation3]
    $region5: #{tpu_custom_call.1} parent=1 // pred_fallthru
      _
    // Predicated region
    $region6: #{tpu_custom_call.1} parent=1 // pred_check
      _
    $region7: #{tpu_custom_call.1} parent=1 // pred_check_branch
      %19 = sbr.rel (0) target = $region9
    $region8: #{tpu_custom_call.1} parent=1 // pred_region
      %20 = dma.done [#allocation3], 256
    $region9: #{tpu_custom_call.1} parent=1 // pred_fallthru
      _
    %v21 = vld [vmem:[#allocation2] sm:$0xff]
    %v22 = vld [vmem:[#allocation2 + $0x8] sm:$0xff]
    %v23 = vadd.f32 %v21, 3.0
    %v24 = vadd.f32 %v22, 3.0
    %v25 = vmax.f32 %v23, 0.0
    %v26 = vmax.f32 %v24, 0.0
    %v27 = vmin.f32 %v25, 6.0
    %v28 = vmin.f32 %v26, 6.0
    %v29 = vmul.f32 %v27, 0.16666667
    %v30 = vmul.f32 %v28, 0.16666667
    %31 = vst [vmem:[#allocation5] sm:$0xff] %v29
    %32 = vst [vmem:[#allocation5 + $0x8] sm:$0xff] %v30
    // Predicated region
    $region10: #{tpu_custom_call.1} parent=1 // pred_check
      _
    $region11: #{tpu_custom_call.1} parent=1 // pred_check_branch
      %34 = sbr.rel (0) target = $region13
    $region12: #{tpu_custom_call.1} parent=1 // pred_region
      %s36 = ssub.s32 256, 256
      %37 = vsyncadd [#allocation4], %s36
      %s39 = sshll.u32 [#allocation5], 4
      %s40 = int_to_ptr.vmem [resolvable:$true] %s39
      %42 = dma.vmem_to_hbm [thread:$0]  %s40, 256, %s1, [#allocation4]
    $region13: #{tpu_custom_call.1} parent=1 // pred_fallthru
      _
    // Predicated region
    $region14: #{tpu_custom_call.1} parent=1 // pred_check
      _
    $region15: #{tpu_custom_call.1} parent=1 // pred_check_branch
      %44 = sbr.rel (0) target = $region17
    $region16: #{tpu_custom_call.1} parent=1 // pred_region
      %45 = dma.done [#allocation4], 256
    $region17: #{tpu_custom_call.1} parent=1 // pred_fallthru
      _
    %46 = vsyncpa [#allocation3], 1
    %47 = vsyncpa [#allocation4], 1

</llo_original>
